<compile_context>
chip_gen: v5e
topology: v5e:2x2
jax: 0.10.0
libtpu: 0.0.40
codegen_flags: <defaults>
</compile_context>

<pallas_src>
import jax
import jax.numpy as jnp
from jax.experimental import pallas as pl
from jax.experimental.pallas import tpu as pltpu

# ----------------------------- configuration -------------------------------
LATENT_DIM   = 8
NUM_CLASSES  = 2
NUM_PARAM    = 4
WINDOW_SIZE  = 8
HIDDEN_DIMS  = [128, 256, 512]
IN_DIM       = LATENT_DIM + NUM_CLASSES
OUTPUT_DIM   = NUM_PARAM * WINDOW_SIZE
SCALE_FLAG   = 0          # 0 -> Sigmoid output activation (default behaviour)


def _round_up(x, m):
    return (x + m - 1) // m * m


# ------------------------------- kernel ------------------------------------
def decoder_kernel(z_ref, y_ref,
                   w1z_ref, w1y_ref, b1_ref,
                   w2_ref, b2_ref,
                   w3_ref, b3_ref,
                   wo_ref, bo_ref,
                   out_ref):
    """One (TM, *) batch tile of the MLP: 3x Linear+ReLU, Linear+Sigmoid.

    Weights arrive as bf16, accumulation is f32 on the MXU; elementwise math
    (bias add / ReLU / sigmoid) runs in f32 on the VPU/EUP.
    """
    # fc1: split-dot replaces torch.cat([z, y], dim=1) @ W1
    h = (jnp.dot(z_ref[...].astype(jnp.bfloat16), w1z_ref[...],
                 preferred_element_type=jnp.float32)
         + jnp.dot(y_ref[...].astype(jnp.bfloat16), w1y_ref[...],
                   preferred_element_type=jnp.float32)
         + b1_ref[...])
    h = jnp.maximum(h, 0.0)

    # fc2 + relu
    h = jnp.dot(h.astype(jnp.bfloat16), w2_ref[...],
                preferred_element_type=jnp.float32) + b2_ref[...]
    h = jnp.maximum(h, 0.0)

    # fc3 + relu
    h = jnp.dot(h.astype(jnp.bfloat16), w3_ref[...],
                preferred_element_type=jnp.float32) + b3_ref[...]
    h = jnp.maximum(h, 0.0)

    # output layer
    o = jnp.dot(h.astype(jnp.bfloat16), wo_ref[...],
                preferred_element_type=jnp.float32) + bo_ref[...]

    if SCALE_FLAG == 0:
        # sigmoid via EUP exp + approx reciprocal (keeps the epilogue off the VALU)
        o = pl.reciprocal(1.0 + jnp.exp(-o), approx=True)
    # else: Identity

    out_ref[...] = o.astype(out_ref.dtype)


# ------------------------------- wrapper ------------------------------------
def decoder_forward(z, y_onehot, params):
    """z: (B, latent_dim) f32, y_onehot: (B, num_classes) f32."""
    B = z.shape[0]

    # --- batch tile selection (MXU-aligned when the batch is large) ---------
    if B >= 512:
        TM = 512
    elif B >= 256:
        TM = 256
    else:
        TM = _round_up(B, 8)
    B_pad = _round_up(B, TM)

    if B_pad != B:
        z = jnp.pad(z, ((0, B_pad - B), (0, 0)))
        y_onehot = jnp.pad(y_onehot, ((0, B_pad - B), (0, 0)))

    # --- parameters: bf16 weights (halves weight DMA), f32 biases -----------
    (w1, b1), (w2, b2), (w3, b3), (wo, bo) = params
    w1z = w1[:LATENT_DIM].astype(jnp.bfloat16)
    w1y = w1[LATENT_DIM:].astype(jnp.bfloat16)
    w2b = w2.astype(jnp.bfloat16)
    w3b = w3.astype(jnp.bfloat16)
    wob = wo.astype(jnp.bfloat16)

    weights = (w1z, w1y, b1, w2b, b2, w3b, b3, wob, bo)

    # --- BlockSpecs ----------------------------------------------------------
    def resident(a):
        # full-array block, same block for every grid step -> loaded once,
        # stays in VMEM while activation tiles stream.
        return pl.BlockSpec(a.shape, lambda i: (0, 0))

    in_specs = [
        pl.BlockSpec((TM, LATENT_DIM), lambda i: (i, 0)),
        pl.BlockSpec((TM, NUM_CLASSES), lambda i: (i, 0)),
    ] + [resident(a) for a in weights]

    out_specs = pl.BlockSpec((TM, OUTPUT_DIM), lambda i: (i, 0))

    # --- cost estimate (helps XLA schedule around the custom call) ----------
    flops = 2 * B_pad * (IN_DIM * HIDDEN_DIMS[0]
                         + HIDDEN_DIMS[0] * HIDDEN_DIMS[1]
                         + HIDDEN_DIMS[1] * HIDDEN_DIMS[2]
                         + HIDDEN_DIMS[2] * OUTPUT_DIM)
    weight_bytes = sum(int(a.size) * a.dtype.itemsize for a in weights)
    bytes_accessed = weight_bytes + B_pad * (IN_DIM + OUTPUT_DIM) * 4
    cost = pl.CostEstimate(flops=flops,
                           transcendentals=B_pad * OUTPUT_DIM,
                           bytes_accessed=bytes_accessed)

    out_flat = pl.pallas_call(
        decoder_kernel,
        out_shape=jax.ShapeDtypeStruct((B_pad, OUTPUT_DIM), jnp.float32),
        grid=(B_pad // TM,),
        in_specs=in_specs,
        out_specs=out_specs,
        compiler_params=pltpu.CompilerParams(
            dimension_semantics=("parallel",),      # shard batch tiles across TCs
            vmem_limit_bytes=32 * 1024 * 1024,      # comfortable on v5e/v6e/v7x
        ),
        cost_estimate=cost,
    )(z, y_onehot, *weights)

    # glue: drop batch padding, reshape(-1, num_param, window_size)
    return out_flat[:B].reshape(-1, NUM_PARAM, WINDOW_SIZE)


# ------------------------- deterministic parameters --------------------------
def init_params(key):
    """Mimics nn.Linear default init (uniform +-1/sqrt(fan_in)); weights stored
    as (in, out) for direct x @ W matmul. Kept in f32; kernel casts to bf16."""
    params = []
    last_dim = IN_DIM
    dims = HIDDEN_DIMS + [OUTPUT_DIM]
    for h_dim in dims:
        key, kw, kb = jax.random.split(key, 3)
        bound = 1.0 / jnp.sqrt(last_dim)
        w = jax.random.uniform(kw, (last_dim, h_dim), jnp.float32, -bound, bound)
        b = jax.random.uniform(kb, (1, h_dim), jnp.float32, -bound, bound)
        params.append((w, b))
        last_dim = h_dim
    return params


# --------------------------------- main --------------------------------------
if __name__ == "__main__":
    key = jax.random.PRNGKey(0)
    k_params, k_z, k_y = jax.random.split(key, 3)

    params = init_params(k_params)

    B = 2
    z = jax.random.normal(k_z, (B, LATENT_DIM), jnp.float32)
    labels = jax.random.randint(k_y, (B,), 0, NUM_CLASSES)
    y_onehot = jax.nn.one_hot(labels, NUM_CLASSES, dtype=jnp.float32)

    out = decoder_forward(z, y_onehot, params)
    out = jax.block_until_ready(out)

    # sanity: f32 reference computation in plain JAX (module semantics)
    x_ref = jnp.concatenate([z, y_onehot], axis=1)
    h = x_ref
    for (w, b) in params[:-1]:
        h = jnp.maximum(h @ w + b, 0.0)
    wo, bo = params[-1]
    ref = jax.nn.sigmoid(h @ wo + bo).reshape(-1, NUM_PARAM, WINDOW_SIZE)

    assert out.shape == (B, NUM_PARAM, WINDOW_SIZE), out.shape
    # bf16 matmuls + approx reciprocal -> loosened tolerance vs f32 reference
    assert jnp.allclose(out, ref, atol=2e-2, rtol=0.0), "mismatch vs reference"

    print("KERNEL_OK")
</pallas_src>

<mosaic_0001>
module attributes {stable_mosaic.version = 11 : i64} {
  func.func @decoder_kernel(%arg0: i32, %arg1: memref<8x8xf32, #tpu.memory_space<vmem>>, %arg2: memref<8x2xf32, #tpu.memory_space<vmem>>, %arg3: memref<8x128xbf16, #tpu.memory_space<vmem>>, %arg4: memref<2x128xbf16, #tpu.memory_space<vmem>>, %arg5: memref<1x128xf32, #tpu.memory_space<vmem>>, %arg6: memref<128x256xbf16, #tpu.memory_space<vmem>>, %arg7: memref<1x256xf32, #tpu.memory_space<vmem>>, %arg8: memref<256x512xbf16, #tpu.memory_space<vmem>>, %arg9: memref<1x512xf32, #tpu.memory_space<vmem>>, %arg10: memref<512x32xbf16, #tpu.memory_space<vmem>>, %arg11: memref<1x32xf32, #tpu.memory_space<vmem>>, %arg12: memref<8x32xf32, #tpu.memory_space<vmem>>) attributes {dimension_semantics = [#tpu.dimension_semantics<parallel>], iteration_bounds = array<i64: 1>, scalar_prefetch = 0 : i64, scratch_operands = 0 : i64, tpu.core_type = #tpu.core_type<tc>, window_params = [{transform_indices = @transform_0, window_bounds = array<i64: 8, 8>}, {transform_indices = @transform_1, window_bounds = array<i64: 8, 2>}, {pipeline_mode = #tpu.pipeline_mode<synchronous>, transform_indices = @transform_2, window_bounds = array<i64: 8, 128>}, {pipeline_mode = #tpu.pipeline_mode<synchronous>, transform_indices = @transform_3, window_bounds = array<i64: 2, 128>}, {pipeline_mode = #tpu.pipeline_mode<synchronous>, transform_indices = @transform_4, window_bounds = array<i64: 1, 128>}, {pipeline_mode = #tpu.pipeline_mode<synchronous>, transform_indices = @transform_5, window_bounds = array<i64: 128, 256>}, {pipeline_mode = #tpu.pipeline_mode<synchronous>, transform_indices = @transform_6, window_bounds = array<i64: 1, 256>}, {pipeline_mode = #tpu.pipeline_mode<synchronous>, transform_indices = @transform_7, window_bounds = array<i64: 256, 512>}, {pipeline_mode = #tpu.pipeline_mode<synchronous>, transform_indices = @transform_8, window_bounds = array<i64: 1, 512>}, {pipeline_mode = #tpu.pipeline_mode<synchronous>, transform_indices = @transform_9, window_bounds = array<i64: 512, 32>}, {pipeline_mode = #tpu.pipeline_mode<synchronous>, transform_indices = @transform_10, window_bounds = array<i64: 1, 32>}, {transform_indices = @transform_11, window_bounds = array<i64: 8, 32>}]} {
    %c0 = arith.constant 0 : index
    %c0_0 = arith.constant 0 : index
    %0 = vector.load %arg1[%c0, %c0_0] : memref<8x8xf32, #tpu.memory_space<vmem>>, vector<8x8xf32>
    %1 = arith.truncf %0 : vector<8x8xf32> to vector<8x8xbf16>
    %c0_1 = arith.constant 0 : index
    %c0_2 = arith.constant 0 : index
    %2 = vector.load %arg3[%c0_1, %c0_2] : memref<8x128xbf16, #tpu.memory_space<vmem>>, vector<8x128xbf16>
    %cst = arith.constant dense<0.000000e+00> : vector<8x128xf32>
    %3 = tpu.matmul %1, %2, %cst {dimension_numbers = #tpu.dot_dimension_numbers<[1], [0], [0], [1], [0, 0, 1, 1], [], []>} : vector<8x8xbf16>, vector<8x128xbf16>, vector<8x128xf32> -> vector<8x128xf32>
    %c0_3 = arith.constant 0 : index
    %c0_4 = arith.constant 0 : index
    %4 = vector.load %arg2[%c0_3, %c0_4] : memref<8x2xf32, #tpu.memory_space<vmem>>, vector<8x2xf32>
    %5 = arith.truncf %4 : vector<8x2xf32> to vector<8x2xbf16>
    %c0_5 = arith.constant 0 : index
    %c0_6 = arith.constant 0 : index
    %6 = vector.load %arg4[%c0_5, %c0_6] : memref<2x128xbf16, #tpu.memory_space<vmem>>, vector<2x128xbf16>
    %cst_7 = arith.constant dense<0.000000e+00> : vector<8x128xf32>
    %7 = tpu.matmul %5, %6, %cst_7 {dimension_numbers = #tpu.dot_dimension_numbers<[1], [0], [0], [1], [0, 0, 1, 1], [], []>} : vector<8x2xbf16>, vector<2x128xbf16>, vector<8x128xf32> -> vector<8x128xf32>
    %8 = arith.addf %3, %7 : vector<8x128xf32>
    %c0_8 = arith.constant 0 : index
    %c0_9 = arith.constant 0 : index
    %9 = vector.load %arg5[%c0_8, %c0_9] : memref<1x128xf32, #tpu.memory_space<vmem>>, vector<1x128xf32>
    %10 = vector.broadcast %9 : vector<1x128xf32> to vector<8x128xf32>
    %11 = arith.addf %8, %10 : vector<8x128xf32>
    %cst_10 = arith.constant 0.000000e+00 : f32
    %12 = vector.broadcast %cst_10 : f32 to vector<8x128xf32>
    %13 = arith.maximumf %11, %12 : vector<8x128xf32>
    %14 = arith.truncf %13 : vector<8x128xf32> to vector<8x128xbf16>
    %c0_11 = arith.constant 0 : index
    %c0_12 = arith.constant 0 : index
    %15 = vector.load %arg6[%c0_11, %c0_12] : memref<128x256xbf16, #tpu.memory_space<vmem>>, vector<128x256xbf16>
    %cst_13 = arith.constant dense<0.000000e+00> : vector<8x256xf32>
    %16 = tpu.matmul %14, %15, %cst_13 {dimension_numbers = #tpu.dot_dimension_numbers<[1], [0], [0], [1], [0, 0, 1, 1], [], []>} : vector<8x128xbf16>, vector<128x256xbf16>, vector<8x256xf32> -> vector<8x256xf32>
    %c0_14 = arith.constant 0 : index
    %c0_15 = arith.constant 0 : index
    %17 = vector.load %arg7[%c0_14, %c0_15] : memref<1x256xf32, #tpu.memory_space<vmem>>, vector<1x256xf32>
    %18 = vector.broadcast %17 : vector<1x256xf32> to vector<8x256xf32>
    %19 = arith.addf %16, %18 : vector<8x256xf32>
    %cst_16 = arith.constant 0.000000e+00 : f32
    %20 = vector.broadcast %cst_16 : f32 to vector<8x256xf32>
    %21 = arith.maximumf %19, %20 : vector<8x256xf32>
    %22 = arith.truncf %21 : vector<8x256xf32> to vector<8x256xbf16>
    %c0_17 = arith.constant 0 : index
    %c0_18 = arith.constant 0 : index
    %23 = vector.load %arg8[%c0_17, %c0_18] : memref<256x512xbf16, #tpu.memory_space<vmem>>, vector<256x512xbf16>
    %cst_19 = arith.constant dense<0.000000e+00> : vector<8x512xf32>
    %24 = tpu.matmul %22, %23, %cst_19 {dimension_numbers = #tpu.dot_dimension_numbers<[1], [0], [0], [1], [0, 0, 1, 1], [], []>} : vector<8x256xbf16>, vector<256x512xbf16>, vector<8x512xf32> -> vector<8x512xf32>
    %c0_20 = arith.constant 0 : index
    %c0_21 = arith.constant 0 : index
    %25 = vector.load %arg9[%c0_20, %c0_21] : memref<1x512xf32, #tpu.memory_space<vmem>>, vector<1x512xf32>
    %26 = vector.broadcast %25 : vector<1x512xf32> to vector<8x512xf32>
    %27 = arith.addf %24, %26 : vector<8x512xf32>
    %cst_22 = arith.constant 0.000000e+00 : f32
    %28 = vector.broadcast %cst_22 : f32 to vector<8x512xf32>
    %29 = arith.maximumf %27, %28 : vector<8x512xf32>
    %30 = arith.truncf %29 : vector<8x512xf32> to vector<8x512xbf16>
    %c0_23 = arith.constant 0 : index
    %c0_24 = arith.constant 0 : index
    %31 = vector.load %arg10[%c0_23, %c0_24] : memref<512x32xbf16, #tpu.memory_space<vmem>>, vector<512x32xbf16>
    %cst_25 = arith.constant dense<0.000000e+00> : vector<8x32xf32>
    %32 = tpu.matmul %30, %31, %cst_25 {dimension_numbers = #tpu.dot_dimension_numbers<[1], [0], [0], [1], [0, 0, 1, 1], [], []>} : vector<8x512xbf16>, vector<512x32xbf16>, vector<8x32xf32> -> vector<8x32xf32>
    %c0_26 = arith.constant 0 : index
    %c0_27 = arith.constant 0 : index
    %33 = vector.load %arg11[%c0_26, %c0_27] : memref<1x32xf32, #tpu.memory_space<vmem>>, vector<1x32xf32>
    %34 = vector.broadcast %33 : vector<1x32xf32> to vector<8x32xf32>
    %35 = arith.addf %32, %34 : vector<8x32xf32>
    %cst_28 = arith.constant 0.000000e+00 : f32
    %36 = vector.broadcast %cst_28 : f32 to vector<8x32xf32>
    %37 = arith.subf %36, %35 : vector<8x32xf32>
    %38 = math.exp %37 : vector<8x32xf32>
    %cst_29 = arith.constant 1.000000e+00 : f32
    %39 = vector.broadcast %cst_29 : f32 to vector<8x32xf32>
    %40 = arith.addf %39, %38 : vector<8x32xf32>
    %41 = tpu.reciprocal %40 {approx = true} : vector<8x32xf32> -> vector<8x32xf32>
    %c0_30 = arith.constant 0 : index
    %c0_31 = arith.constant 0 : index
    %42 = vector.load %arg12[%c0_30, %c0_31] : memref<8x32xf32, #tpu.memory_space<vmem>>, vector<8x32xf32>
    tpu.vector_store %arg12[%c0_30, %c0_31], %41 {strides = array<i32>} : memref<8x32xf32, #tpu.memory_space<vmem>>, vector<8x32xf32>,
    return
  }
  func.func @transform_0(%arg0: i32) -> (i32, i32) {
    %c0_i32 = arith.constant 0 : i32
    %c0_i32_0 = arith.constant 0 : i32
    return %arg0, %c0_i32 : i32, i32
  }
  func.func @transform_1(%arg0: i32) -> (i32, i32) {
    %c0_i32 = arith.constant 0 : i32
    %c0_i32_0 = arith.constant 0 : i32
    return %arg0, %c0_i32 : i32, i32
  }
  func.func @transform_2(%arg0: i32) -> (i32, i32) {
    %c0_i32 = arith.constant 0 : i32
    %c0_i32_0 = arith.constant 0 : i32
    %c0_i32_1 = arith.constant 0 : i32
    return %c0_i32, %c0_i32_0 : i32, i32
  }
  func.func @transform_3(%arg0: i32) -> (i32, i32) {
    %c0_i32 = arith.constant 0 : i32
    %c0_i32_0 = arith.constant 0 : i32
    %c0_i32_1 = arith.constant 0 : i32
    return %c0_i32, %c0_i32_0 : i32, i32
  }
  func.func @transform_4(%arg0: i32) -> (i32, i32) {
    %c0_i32 = arith.constant 0 : i32
    %c0_i32_0 = arith.constant 0 : i32
    %c0_i32_1 = arith.constant 0 : i32
    return %c0_i32, %c0_i32_0 : i32, i32
  }
  func.func @transform_5(%arg0: i32) -> (i32, i32) {
    %c0_i32 = arith.constant 0 : i32
    %c0_i32_0 = arith.constant 0 : i32
    %c0_i32_1 = arith.constant 0 : i32
    return %c0_i32, %c0_i32_0 : i32, i32
  }
  func.func @transform_6(%arg0: i32) -> (i32, i32) {
    %c0_i32 = arith.constant 0 : i32
    %c0_i32_0 = arith.constant 0 : i32
    %c0_i32_1 = arith.constant 0 : i32
    return %c0_i32, %c0_i32_0 : i32, i32
  }
  func.func @transform_7(%arg0: i32) -> (i32, i32) {
    %c0_i32 = arith.constant 0 : i32
    %c0_i32_0 = arith.constant 0 : i32
    %c0_i32_1 = arith.constant 0 : i32
    return %c0_i32, %c0_i32_0 : i32, i32
  }
  func.func @transform_8(%arg0: i32) -> (i32, i32) {
    %c0_i32 = arith.constant 0 : i32
    %c0_i32_0 = arith.constant 0 : i32
    %c0_i32_1 = arith.constant 0 : i32
    return %c0_i32, %c0_i32_0 : i32, i32
  }
  func.func @transform_9(%arg0: i32) -> (i32, i32) {
    %c0_i32 = arith.constant 0 : i32
    %c0_i32_0 = arith.constant 0 : i32
    %c0_i32_1 = arith.constant 0 : i32
    return %c0_i32, %c0_i32_0 : i32, i32
  }
  func.func @transform_10(%arg0: i32) -> (i32, i32) {
    %c0_i32 = arith.constant 0 : i32
    %c0_i32_0 = arith.constant 0 : i32
    %c0_i32_1 = arith.constant 0 : i32
    return %c0_i32, %c0_i32_0 : i32, i32
  }
  func.func @transform_11(%arg0: i32) -> (i32, i32) {
    %c0_i32 = arith.constant 0 : i32
    %c0_i32_0 = arith.constant 0 : i32
    return %arg0, %c0_i32 : i32, i32
  }
}

</mosaic_0001>

<llo_original>
// kernel: tpu_custom_call.1
$region0: #{tpu_custom_call.1}
  #allocation0 [shape = 'u32[]', space=smem, size = 0x4, offset = 0x4, fixed_abs, tag = 'smem constant byte address 0x4 - core index']
  #allocation1 [shape = 'u32[72,128]{1,0:T(1,128)}', space=vmem, size = 0x9000, scoped, tag = 'internal scratch']
  %s0 = inlined_call_operand.vmem [shape: f32[8,8], index: 0, kind: input, shape index: {}]
  %s1 = inlined_call_operand.vmem [shape: f32[8,2], index: 1, kind: input, shape index: {}]
  %s2 = inlined_call_operand.vmem [shape: bf16[8,128], index: 2, kind: input, shape index: {}]
  %s3 = inlined_call_operand.vmem [shape: bf16[2,128], index: 3, kind: input, shape index: {}]
  %s4 = inlined_call_operand.vmem [shape: f32[1,128], index: 4, kind: input, shape index: {}]
  %s5 = inlined_call_operand.vmem [shape: bf16[128,256], index: 5, kind: input, shape index: {}]
  %s6 = inlined_call_operand.vmem [shape: f32[1,256], index: 6, kind: input, shape index: {}]
  %s7 = inlined_call_operand.hbm [shape: bf16[256,512], index: 7, kind: input, shape index: {}]
  %s8 = inlined_call_operand.vmem [shape: f32[1,512], index: 8, kind: input, shape index: {}]
  %s9 = inlined_call_operand.vmem [shape: bf16[512,32], index: 9, kind: input, shape index: {}]
  %s10 = inlined_call_operand.vmem [shape: f32[1,32], index: 10, kind: input, shape index: {}]
  %s11 = inlined_call_operand.hbm [shape: f32[8,32], index: 11, kind: output, shape index: {}]
  %s12 = sld [smem:[#allocation0]]
  $region58: #{tpu_custom_call.1} parent=0
    _
  %s14 = ssub.s32 1, %s12
  %s15 = scalar_select 0, %s14, %s12
  $region1: #{tpu_custom_call.1} parent=0
    #allocation2 [shape = 'u8[262144]{0}', space=vmem, size = 0x40000, scoped, tag = 'input window, operand 7, single buffered']
    #allocation3 [shape = 's32[1]{0}', space=sflag, size = 0x4, scoped, tag = 'scoped memory for tpu_custom_call.1']
    #allocation4 [shape = 's32[1]{0}', space=sflag, size = 0x4, scoped, tag = 'scoped memory for tpu_custom_call.1']
    #allocation5 [shape = 'u8[4096]{0}', space=vmem, size = 0x1000, scoped, tag = 'output window, operand 0, single buffered']
    %16 = vsyncpa [#allocation3], 0
    %17 = vsyncpa [#allocation4], 0
    // Predicated region
    $region2: #{tpu_custom_call.1} parent=1 // pred_check
      _
    $region3: #{tpu_custom_call.1} parent=1 // pred_check_branch
      %19 = sbr.rel (0) target = $region5
    $region4: #{tpu_custom_call.1} parent=1 // pred_region
      _
    $region5: #{tpu_custom_call.1} parent=1 // pred_fallthru
      _
    // Predicated region
    $region6: #{tpu_custom_call.1} parent=1 // pred_check
      _
    $region7: #{tpu_custom_call.1} parent=1 // pred_check_branch
      %21 = sbr.rel (0) target = $region9
    $region8: #{tpu_custom_call.1} parent=1 // pred_region
      _
    $region9: #{tpu_custom_call.1} parent=1 // pred_fallthru
      _
    // Predicated region
    $region10: #{tpu_custom_call.1} parent=1 // pred_check
      _
    $region11: #{tpu_custom_call.1} parent=1 // pred_check_branch
      %23 = sbr.rel (0) target = $region13
    $region12: #{tpu_custom_call.1} parent=1 // pred_region
      _
    $region13: #{tpu_custom_call.1} parent=1 // pred_fallthru
      _
    // Predicated region
    $region14: #{tpu_custom_call.1} parent=1 // pred_check
      _
    $region15: #{tpu_custom_call.1} parent=1 // pred_check_branch
      %25 = sbr.rel (0) target = $region17
    $region16: #{tpu_custom_call.1} parent=1 // pred_region
      _
    $region17: #{tpu_custom_call.1} parent=1 // pred_fallthru
      _
    // Predicated region
    $region18: #{tpu_custom_call.1} parent=1 // pred_check
      _
    $region19: #{tpu_custom_call.1} parent=1 // pred_check_branch
      %27 = sbr.rel (0) target = $region21
    $region20: #{tpu_custom_call.1} parent=1 // pred_region
      _
    $region21: #{tpu_custom_call.1} parent=1 // pred_fallthru
      _
    // Predicated region
    $region22: #{tpu_custom_call.1} parent=1 // pred_check
      _
    $region23: #{tpu_custom_call.1} parent=1 // pred_check_branch
      %29 = sbr.rel (0) target = $region25
    $region24: #{tpu_custom_call.1} parent=1 // pred_region
      _
    $region25: #{tpu_custom_call.1} parent=1 // pred_fallthru
      _
    // Predicated region
    $region26: #{tpu_custom_call.1} parent=1 // pred_check
      _
    $region27: #{tpu_custom_call.1} parent=1 // pred_check_branch
      %31 = sbr.rel (0) target = $region29
    $region28: #{tpu_custom_call.1} parent=1 // pred_region
      _
    $region29: #{tpu_custom_call.1} parent=1 // pred_fallthru
      _
    // Predicated region
    $region30: #{tpu_custom_call.1} parent=1 // pred_check
      _
    $region31: #{tpu_custom_call.1} parent=1 // pred_check_branch
      %33 = sbr.rel (0) target = $region33
    $region32: #{tpu_custom_call.1} parent=1 // pred_region
      %35 = vsyncadd [#allocation3], 0
      %s36 = sshll.u32 %s7, 4
      %s37 = int_to_ptr.hbm [resolvable:$true] %s36
      %s38 = sshll.u32 [#allocation2], 4
      %s39 = int_to_ptr.vmem [resolvable:$true] %s38
      %44 = dma.hbm_to_vmem [thread:$0]  %s37, 8192, %s39, [#allocation3], 256, 256, 16
    $region33: #{tpu_custom_call.1} parent=1 // pred_fallthru
      _
    // Predicated region
    $region34: #{tpu_custom_call.1} parent=1 // pred_check
      _
    $region35: #{tpu_custom_call.1} parent=1 // pred_check_branch
      %46 = sbr.rel (0) target = $region37
    $region36: #{tpu_custom_call.1} parent=1 // pred_region
      _
    $region37: #{tpu_custom_call.1} parent=1 // pred_fallthru
      _
    // Predicated region
    $region38: #{tpu_custom_call.1} parent=1 // pred_check
      _
    $region39: #{tpu_custom_call.1} parent=1 // pred_check_branch
      %48 = sbr.rel (0) target = $region41
    $region40: #{tpu_custom_call.1} parent=1 // pred_region
      _
    $region41: #{tpu_custom_call.1} parent=1 // pred_fallthru
      _
    // Predicated region
    $region42: #{tpu_custom_call.1} parent=1 // pred_check
      _
    $region43: #{tpu_custom_call.1} parent=1 // pred_check_branch
      %50 = sbr.rel (0) target = $region45
    $region44: #{tpu_custom_call.1} parent=1 // pred_region
      _
    $region45: #{tpu_custom_call.1} parent=1 // pred_fallthru
      _
    // Predicated region
    $region46: #{tpu_custom_call.1} parent=1 // pred_check
      _
    $region47: #{tpu_custom_call.1} parent=1 // pred_check_branch
      %52 = sbr.rel (0) target = $region49
    $region48: #{tpu_custom_call.1} parent=1 // pred_region
      %54 = dma.done [#allocation3], 8192
    $region49: #{tpu_custom_call.1} parent=1 // pred_fallthru
      _
    %v56 = vld [vmem:[%s0] sm:$0xff]
    %v57 = vpack.c.bf16 %v56, %v56
    %v58 = vld [vmem:[%s2] sm:$0xf]
    %v59 = vld [vmem:[%s1] sm:$0xff]
    %v60 = vpack.c.bf16 %v59, %v59
    %v61 = vld [vmem:[%s3] sm:$0x1]
    %vm62 = vcmask 15360
    %v64 = vsel %vm62, %v60, 0
    %vm66 = vcmask 1040384
    %v68 = vsel %vm66, %v61, 0
    %70 = vmatpush.bf16.msra.mxu0 0
    %71 = vmatpush.bf16.msra.mxu0 0
    %72 = vmatpush.bf16.msra.mxu0 0
    %73 = vmatpush.bf16.msra.mxu0 0
    %74 = vmatpush.bf16.msra.mxu0 0
    %75 = vmatpush.bf16.msra.mxu0 0
    %76 = vmatpush.bf16.msra.mxu0 0
    %77 = vmatpush.bf16.msra.mxu0 %v68
    %78 = vmatmul.bf16.gmra.mxu0 %v64
    %v79 = vpop.f32.mrf.mxu0
    %v80 = vadd.f32 0.0, %v79
    %v81 = vpop.f32.mrf.mxu0
    %82 = vdwg.mxu0
    %vm83 = vcmask 64512
    %v85 = vsel %vm83, %v57, 0
    %vm87 = vcmask 1043456
    %v89 = vsel %vm87, %v58, 0
    %91 = vmatpush.bf16.msra.mxu0 0
    %92 = vmatpush.bf16.msra.mxu0 0
    %93 = vmatpush.bf16.msra.mxu0 0
    %94 = vmatpush.bf16.msra.mxu0 0
    %95 = vmatpush.bf16.msra.mxu0 0
    %96 = vmatpush.bf16.msra.mxu0 0
    %97 = vmatpush.bf16.msra.mxu0 0
    %98 = vmatpush.bf16.msra.mxu0 %v89
    %99 = vmatmul.bf16.gmra.mxu0 %v85
    %v100 = vpop.f32.mrf.mxu0
    %v101 = vadd.f32 %v80, %v100
    %v102 = vpop.f32.mrf.mxu0
    %103 = vdwg.mxu0
    %v104 = vld [vmem:[%s4] sm:$0x1]
    %v106 = vperm.slane %v104, 0
    %v108 = vadd.f32 %v101, %v106
    %v109 = vmax.f32 %v108, 0.0
    %v110 = vpack.c.bf16 %v109, %v109
    %v111 = vld [vmem:[%s5] sm:$0xff]
    %v112 = vld [vmem:[%s5 + $0x8] sm:$0xff]
    %v113 = vld [vmem:[%s5 + $0x10] sm:$0xff]
    %v114 = vld [vmem:[%s5 + $0x18] sm:$0xff]
    %v115 = vld [vmem:[%s5 + $0x20] sm:$0xff]
    %v116 = vld [vmem:[%s5 + $0x28] sm:$0xff]
    %v117 = vld [vmem:[%s5 + $0x30] sm:$0xff]
    %v118 = vld [vmem:[%s5 + $0x38] sm:$0xff]
    %v119 = vld [vmem:[%s5 + $0x40] sm:$0xff]
    %v120 = vld [vmem:[%s5 + $0x48] sm:$0xff]
    %v121 = vld [vmem:[%s5 + $0x50] sm:$0xff]
    %v122 = vld [vmem:[%s5 + $0x58] sm:$0xff]
    %v123 = vld [vmem:[%s5 + $0x60] sm:$0xff]
    %v124 = vld [vmem:[%s5 + $0x68] sm:$0xff]
    %v125 = vld [vmem:[%s5 + $0x70] sm:$0xff]
    %v126 = vld [vmem:[%s5 + $0x78] sm:$0xff]
    %v127 = vld [vmem:[%s6] sm:$0x3]
    %v129 = vperm.slane %v127, 0
    %v130 = vperm.slane %v127, 1
    %v149 = vunpack.c.l.b16 %v111
    %v150 = vunpack.c.h.b16 %v111
    %v151 = vunpack.c.l.b16 %v112
    %v152 = vunpack.c.h.b16 %v112
    %v153 = vunpack.c.l.b16 %v113
    %v154 = vunpack.c.h.b16 %v113
    %v155 = vunpack.c.l.b16 %v114
    %v156 = vunpack.c.h.b16 %v114
    %v157 = vunpack.c.l.b16 %v115
    %v158 = vunpack.c.h.b16 %v115
    %v159 = vunpack.c.l.b16 %v116
    %v160 = vunpack.c.h.b16 %v116
    %v161 = vunpack.c.l.b16 %v117
    %v162 = vunpack.c.h.b16 %v117
    %v163 = vunpack.c.l.b16 %v118
    %v164 = vunpack.c.h.b16 %v118
    %v165 = vunpack.c.l.b16 %v119
    %v166 = vunpack.c.h.b16 %v119
    %v167 = vunpack.c.l.b16 %v120
    %v168 = vunpack.c.h.b16 %v120
    %v169 = vunpack.c.l.b16 %v121
    %v170 = vunpack.c.h.b16 %v121
    %v171 = vunpack.c.l.b16 %v122
    %v172 = vunpack.c.h.b16 %v122
    %v173 = vunpack.c.l.b16 %v123
    %v174 = vunpack.c.h.b16 %v123
    %v175 = vunpack.c.l.b16 %v124
    %v176 = vunpack.c.h.b16 %v124
    %v177 = vunpack.c.l.b16 %v125
    %v178 = vunpack.c.h.b16 %v125
    %v179 = vunpack.c.l.b16 %v126
    %v180 = vunpack.c.h.b16 %v126
    %v181 = vpack.c.b16 %v151, %v149
    %v182 = vpack.c.b16 %v152, %v150
    %v183 = vpack.c.b16 %v155, %v153
    %v184 = vpack.c.b16 %v156, %v154
    %v185 = vpack.c.b16 %v159, %v157
    %v186 = vpack.c.b16 %v160, %v158
    %v187 = vpack.c.b16 %v163, %v161
    %v188 = vpack.c.b16 %v164, %v162
    %v189 = vpack.c.b16 %v167, %v165
    %v190 = vpack.c.b16 %v168, %v166
    %v191 = vpack.c.b16 %v171, %v169
    %v192 = vpack.c.b16 %v172, %v170
    %v193 = vpack.c.b16 %v175, %v173
    %v194 = vpack.c.b16 %v176, %v174
    %v195 = vpack.c.b16 %v179, %v177
    %v196 = vpack.c.b16 %v180, %v178
    %213 = vmatpush.bf16.msra.mxu0 %v195
    %214 = vmatpush.bf16.msra.mxu0 %v193
    %215 = vmatpush.bf16.msra.mxu0 %v191
    %216 = vmatpush.bf16.msra.mxu0 %v189
    %217 = vmatpush.bf16.msra.mxu0 %v187
    %218 = vmatpush.bf16.msra.mxu0 %v185
    %219 = vmatpush.bf16.msra.mxu0 %v183
    %220 = vmatpush.bf16.msra.mxu0 %v181
    %221 = vmatmul.bf16.gmra.mxu0 %v110
    %v222 = vpop.f32.mrf.mxu0
    %v223 = vadd.f32 %v129, %v222
    %v224 = vpop.f32.mrf.mxu0
    %225 = vdwg.mxu0
    %226 = vmatpush.bf16.msra.mxu0 %v196
    %227 = vmatpush.bf16.msra.mxu0 %v194
    %228 = vmatpush.bf16.msra.mxu0 %v192
    %229 = vmatpush.bf16.msra.mxu0 %v190
    %230 = vmatpush.bf16.msra.mxu0 %v188
    %231 = vmatpush.bf16.msra.mxu0 %v186
    %232 = vmatpush.bf16.msra.mxu0 %v184
    %233 = vmatpush.bf16.msra.mxu0 %v182
    %234 = vmatmul.bf16.gmra.mxu0 %v110
    %v235 = vpop.f32.mrf.mxu0
    %v236 = vadd.f32 %v130, %v235
    %v237 = vpop.f32.mrf.mxu0
    %238 = vdwg.mxu0
    %v239 = vmax.f32 %v223, 0.0
    %v240 = vmax.f32 %v236, 0.0
    %v241 = vpack.c.bf16 %v239, %v239
    %v242 = vpack.c.bf16 %v240, %v240
    %v243 = vld [vmem:[#allocation2] sm:$0xff]
    %v244 = vld [vmem:[#allocation2 + $0x8] sm:$0xff]
    %v245 = vld [vmem:[#allocation2 + $0x10] sm:$0xff]
    %v246 = vld [vmem:[#allocation2 + $0x18] sm:$0xff]
    %v247 = vld [vmem:[#allocation2 + $0x20] sm:$0xff]
    %v248 = vld [vmem:[#allocation2 + $0x28] sm:$0xff]
    %v249 = vld [vmem:[#allocation2 + $0x30] sm:$0xff]
    %v250 = vld [vmem:[#allocation2 + $0x38] sm:$0xff]
    %v251 = vld [vmem:[#allocation2 + $0x40] sm:$0xff]
    %v252 = vld [vmem:[#allocation2 + $0x48] sm:$0xff]
    %v253 = vld [vmem:[#allocation2 + $0x50] sm:$0xff]
    %v254 = vld [vmem:[#allocation2 + $0x58] sm:$0xff]
    %v255 = vld [vmem:[#allocation2 + $0x60] sm:$0xff]
    %v256 = vld [vmem:[#allocation2 + $0x68] sm:$0xff]
    %v257 = vld [vmem:[#allocation2 + $0x70] sm:$0xff]
    %v258 = vld [vmem:[#allocation2 + $0x78] sm:$0xff]
    %v259 = vld [vmem:[#allocation2 + $0x80] sm:$0xff]
    %v260 = vld [vmem:[#allocation2 + $0x88] sm:$0xff]
    %v261 = vld [vmem:[#allocation2 + $0x90] sm:$0xff]
    %v262 = vld [vmem:[#allocation2 + $0x98] sm:$0xff]
    %v263 = vld [vmem:[#allocation2 + $0xa0] sm:$0xff]
    %v264 = vld [vmem:[#allocation2 + $0xa8] sm:$0xff]
    %v265 = vld [vmem:[#allocation2 + $0xb0] sm:$0xff]
    %v266 = vld [vmem:[#allocation2 + $0xb8] sm:$0xff]
    %v267 = vld [vmem:[#allocation2 + $0xc0] sm:$0xff]
    %v268 = vld [vmem:[#allocation2 + $0xc8] sm:$0xff]
    %v269 = vld [vmem:[#allocation2 + $0xd0] sm:$0xff]
    %v270 = vld [vmem:[#allocation2 + $0xd8] sm:$0xff]
    %v271 = vld [vmem:[#allocation2 + $0xe0] sm:$0xff]
    %v272 = vld [vmem:[#allocation2 + $0xe8] sm:$0xff]
    %v273 = vld [vmem:[#allocation2 + $0xf0] sm:$0xff]
    %v274 = vld [vmem:[#allocation2 + $0xf8] sm:$0xff]
    %v275 = vld [vmem:[#allocation2 + $0x100] sm:$0xff]
    %v276 = vld [vmem:[#allocation2 + $0x108] sm:$0xff]
    %v277 = vld [vmem:[#allocation2 + $0x110] sm:$0xff]
    %v278 = vld [vmem:[#allocation2 + $0x118] sm:$0xff]
    %v279 = vld [vmem:[#allocation2 + $0x120] sm:$0xff]
    %v280 = vld [vmem:[#allocation2 + $0x128] sm:$0xff]
    %v281 = vld [vmem:[#allocation2 + $0x130] sm:$0xff]
    %v282 = vld [vmem:[#allocation2 + $0x138] sm:$0xff]
    %v283 = vld [vmem:[#allocation2 + $0x140] sm:$0xff]
    %v284 = vld [vmem:[#allocation2 + $0x148] sm:$0xff]
    %v285 = vld [vmem:[#allocation2 + $0x150] sm:$0xff]
    %v286 = vld [vmem:[#allocation2 + $0x158] sm:$0xff]
    %v287 = vld [vmem:[#allocation2 + $0x160] sm:$0xff]
    %v288 = vld [vmem:[#allocation2 + $0x168] sm:$0xff]
    %v289 = vld [vmem:[#allocation2 + $0x170] sm:$0xff]
    %v290 = vld [vmem:[#allocation2 + $0x178] sm:$0xff]
    %v291 = vld [vmem:[#allocation2 + $0x180] sm:$0xff]
    %v292 = vld [vmem:[#allocation2 + $0x188] sm:$0xff]
    %v293 = vld [vmem:[#allocation2 + $0x190] sm:$0xff]
    %v294 = vld [vmem:[#allocation2 + $0x198] sm:$0xff]
    %v295 = vld [vmem:[#allocation2 + $0x1a0] sm:$0xff]
    %v296 = vld [vmem:[#allocation2 + $0x1a8] sm:$0xff]
    %v297 = vld [vmem:[#allocation2 + $0x1b0] sm:$0xff]
    %v298 = vld [vmem:[#allocation2 + $0x1b8] sm:$0xff]
    %v299 = vld [vmem:[#allocation2 + $0x1c0] sm:$0xff]
    %v300 = vld [vmem:[#allocation2 + $0x1c8] sm:$0xff]
    %v301 = vld [vmem:[#allocation2 + $0x1d0] sm:$0xff]
    %v302 = vld [vmem:[#allocation2 + $0x1d8] sm:$0xff]
    %v303 = vld [vmem:[#allocation2 + $0x1e0] sm:$0xff]
    %v304 = vld [vmem:[#allocation2 + $0x1e8] sm:$0xff]
    %v305 = vld [vmem:[#allocation2 + $0x1f0] sm:$0xff]
    %v306 = vld [vmem:[#allocation2 + $0x1f8] sm:$0xff]
    %v307 = vld [vmem:[%s8] sm:$0xf]
    %v309 = vperm.slane %v307, 0
    %v310 = vperm.slane %v307, 1
    %v311 = vperm.slane %v307, 2
    %v312 = vperm.slane %v307, 3
    %v381 = vunpack.c.l.b16 %v243
    %v382 = vunpack.c.h.b16 %v243
    %v383 = vunpack.c.l.b16 %v244
    %v384 = vunpack.c.h.b16 %v244
    %v385 = vunpack.c.l.b16 %v245
    %v386 = vunpack.c.h.b16 %v245
    %v387 = vunpack.c.l.b16 %v246
    %v388 = vunpack.c.h.b16 %v246
    %v389 = vunpack.c.l.b16 %v247
    %v390 = vunpack.c.h.b16 %v247
    %v391 = vunpack.c.l.b16 %v248
    %v392 = vunpack.c.h.b16 %v248
    %v393 = vunpack.c.l.b16 %v249
    %v394 = vunpack.c.h.b16 %v249
    %v395 = vunpack.c.l.b16 %v250
    %v396 = vunpack.c.h.b16 %v250
    %v397 = vunpack.c.l.b16 %v251
    %v398 = vunpack.c.h.b16 %v251
    %v399 = vunpack.c.l.b16 %v252
    %v400 = vunpack.c.h.b16 %v252
    %v401 = vunpack.c.l.b16 %v253
    %v402 = vunpack.c.h.b16 %v253
    %v403 = vunpack.c.l.b16 %v254
    %v404 = vunpack.c.h.b16 %v254
    %v405 = vunpack.c.l.b16 %v255
    %v406 = vunpack.c.h.b16 %v255
    %v407 = vunpack.c.l.b16 %v256
    %v408 = vunpack.c.h.b16 %v256
    %v409 = vunpack.c.l.b16 %v257
    %v410 = vunpack.c.h.b16 %v257
    %v411 = vunpack.c.l.b16 %v258
    %v412 = vunpack.c.h.b16 %v258
    %v413 = vunpack.c.l.b16 %v259
    %v414 = vunpack.c.h.b16 %v259
    %v415 = vunpack.c.l.b16 %v260
    %v416 = vunpack.c.h.b16 %v260
    %v417 = vunpack.c.l.b16 %v261
    %v418 = vunpack.c.h.b16 %v261
    %v419 = vunpack.c.l.b16 %v262
    %v420 = vunpack.c.h.b16 %v262
    %v421 = vunpack.c.l.b16 %v263
    %v422 = vunpack.c.h.b16 %v263
    %v423 = vunpack.c.l.b16 %v264
    %v424 = vunpack.c.h.b16 %v264
    %v425 = vunpack.c.l.b16 %v265
    %v426 = vunpack.c.h.b16 %v265
    %v427 = vunpack.c.l.b16 %v266
    %v428 = vunpack.c.h.b16 %v266
    %v429 = vunpack.c.l.b16 %v267
    %v430 = vunpack.c.h.b16 %v267
    %v431 = vunpack.c.l.b16 %v268
    %v432 = vunpack.c.h.b16 %v268
    %v433 = vunpack.c.l.b16 %v269
    %v434 = vunpack.c.h.b16 %v269
    %v435 = vunpack.c.l.b16 %v270
    %v436 = vunpack.c.h.b16 %v270
    %v437 = vunpack.c.l.b16 %v271
    %v438 = vunpack.c.h.b16 %v271
    %v439 = vunpack.c.l.b16 %v272
    %v440 = vunpack.c.h.b16 %v272
    %v441 = vunpack.c.l.b16 %v273
    %v442 = vunpack.c.h.b16 %v273
    %v443 = vunpack.c.l.b16 %v274
    %v444 = vunpack.c.h.b16 %v274
    %v445 = vunpack.c.l.b16 %v275
    %v446 = vunpack.c.h.b16 %v275
    %v447 = vunpack.c.l.b16 %v276
    %v448 = vunpack.c.h.b16 %v276
    %v449 = vunpack.c.l.b16 %v277
    %v450 = vunpack.c.h.b16 %v277
    %v451 = vunpack.c.l.b16 %v278
    %v452 = vunpack.c.h.b16 %v278
    %v453 = vunpack.c.l.b16 %v279
    %v454 = vunpack.c.h.b16 %v279
    %v455 = vunpack.c.l.b16 %v280
    %v456 = vunpack.c.h.b16 %v280
    %v457 = vunpack.c.l.b16 %v281
    %v458 = vunpack.c.h.b16 %v281
    %v459 = vunpack.c.l.b16 %v282
    %v460 = vunpack.c.h.b16 %v282
    %v461 = vunpack.c.l.b16 %v283
    %v462 = vunpack.c.h.b16 %v283
    %v463 = vunpack.c.l.b16 %v284
    %v464 = vunpack.c.h.b16 %v284
    %v465 = vunpack.c.l.b16 %v285
    %v466 = vunpack.c.h.b16 %v285
    %v467 = vunpack.c.l.b16 %v286
    %v468 = vunpack.c.h.b16 %v286
    %v469 = vunpack.c.l.b16 %v287
    %v470 = vunpack.c.h.b16 %v287
    %v471 = vunpack.c.l.b16 %v288
    %v472 = vunpack.c.h.b16 %v288
    %v473 = vunpack.c.l.b16 %v289
    %v474 = vunpack.c.h.b16 %v289
    %v475 = vunpack.c.l.b16 %v290
    %v476 = vunpack.c.h.b16 %v290
    %v477 = vunpack.c.l.b16 %v291
    %v478 = vunpack.c.h.b16 %v291
    %v479 = vunpack.c.l.b16 %v292
    %v480 = vunpack.c.h.b16 %v292
    %v481 = vunpack.c.l.b16 %v293
    %v482 = vunpack.c.h.b16 %v293
    %v483 = vunpack.c.l.b16 %v294
    %v484 = vunpack.c.h.b16 %v294
    %v485 = vunpack.c.l.b16 %v295
    %v486 = vunpack.c.h.b16 %v295
    %v487 = vunpack.c.l.b16 %v296
    %v488 = vunpack.c.h.b16 %v296
    %v489 = vunpack.c.l.b16 %v297
    %v490 = vunpack.c.h.b16 %v297
    %v491 = vunpack.c.l.b16 %v298
    %v492 = vunpack.c.h.b16 %v298
    %v493 = vunpack.c.l.b16 %v299
    %v494 = vunpack.c.h.b16 %v299
    %v495 = vunpack.c.l.b16 %v300
    %v496 = vunpack.c.h.b16 %v300
    %v497 = vunpack.c.l.b16 %v301
    %v498 = vunpack.c.h.b16 %v301
    %v499 = vunpack.c.l.b16 %v302
    %v500 = vunpack.c.h.b16 %v302
    %v501 = vunpack.c.l.b16 %v303
    %v502 = vunpack.c.h.b16 %v303
    %v503 = vunpack.c.l.b16 %v304
    %v504 = vunpack.c.h.b16 %v304
    %v505 = vunpack.c.l.b16 %v305
    %v506 = vunpack.c.h.b16 %v305
    %v507 = vunpack.c.l.b16 %v306
    %v508 = vunpack.c.h.b16 %v306
    %v509 = vpack.c.b16 %v385, %v381
    %v510 = vpack.c.b16 %v386, %v382
    %v511 = vpack.c.b16 %v387, %v383
    %v512 = vpack.c.b16 %v388, %v384
    %v513 = vpack.c.b16 %v393, %v389
    %v514 = vpack.c.b16 %v394, %v390
    %v515 = vpack.c.b16 %v395, %v391
    %v516 = vpack.c.b16 %v396, %v392
    %v517 = vpack.c.b16 %v401, %v397
    %v518 = vpack.c.b16 %v402, %v398
    %v519 = vpack.c.b16 %v403, %v399
    %v520 = vpack.c.b16 %v404, %v400
    %v521 = vpack.c.b16 %v409, %v405
    %v522 = vpack.c.b16 %v410, %v406
    %v523 = vpack.c.b16 %v411, %v407
    %v524 = vpack.c.b16 %v412, %v408
    %v525 = vpack.c.b16 %v417, %v413
    %v526 = vpack.c.b16 %v418, %v414
    %v527 = vpack.c.b16 %v419, %v415
    %v528 = vpack.c.b16 %v420, %v416
    %v529 = vpack.c.b16 %v425, %v421
    %v530 = vpack.c.b16 %v426, %v422
    %v531 = vpack.c.b16 %v427, %v423
    %v532 = vpack.c.b16 %v428, %v424
    %v533 = vpack.c.b16 %v433, %v429
    %v534 = vpack.c.b16 %v434, %v430
    %v535 = vpack.c.b16 %v435, %v431
    %v536 = vpack.c.b16 %v436, %v432
    %v537 = vpack.c.b16 %v441, %v437
    %v538 = vpack.c.b16 %v442, %v438
    %v539 = vpack.c.b16 %v443, %v439
    %v540 = vpack.c.b16 %v444, %v440
    %v541 = vpack.c.b16 %v449, %v445
    %v542 = vpack.c.b16 %v450, %v446
    %v543 = vpack.c.b16 %v451, %v447
    %v544 = vpack.c.b16 %v452, %v448
    %v545 = vpack.c.b16 %v457, %v453
    %v546 = vpack.c.b16 %v458, %v454
    %v547 = vpack.c.b16 %v459, %v455
    %v548 = vpack.c.b16 %v460, %v456
    %v549 = vpack.c.b16 %v465, %v461
    %v550 = vpack.c.b16 %v466, %v462
    %v551 = vpack.c.b16 %v467, %v463
    %v552 = vpack.c.b16 %v468, %v464
    %v553 = vpack.c.b16 %v473, %v469
    %v554 = vpack.c.b16 %v474, %v470
    %v555 = vpack.c.b16 %v475, %v471
    %v556 = vpack.c.b16 %v476, %v472
    %v557 = vpack.c.b16 %v481, %v477
    %v558 = vpack.c.b16 %v482, %v478
    %v559 = vpack.c.b16 %v483, %v479
    %v560 = vpack.c.b16 %v484, %v480
    %v561 = vpack.c.b16 %v489, %v485
    %v562 = vpack.c.b16 %v490, %v486
    %v563 = vpack.c.b16 %v491, %v487
    %v564 = vpack.c.b16 %v492, %v488
    %v565 = vpack.c.b16 %v497, %v493
    %v566 = vpack.c.b16 %v498, %v494
    %v567 = vpack.c.b16 %v499, %v495
    %v568 = vpack.c.b16 %v500, %v496
    %v569 = vpack.c.b16 %v505, %v501
    %v570 = vpack.c.b16 %v506, %v502
    %v571 = vpack.c.b16 %v507, %v503
    %v572 = vpack.c.b16 %v508, %v504
    %637 = vmatpush.bf16.msra.mxu0 %v537
    %638 = vmatpush.bf16.msra.mxu0 %v533
    %639 = vmatpush.bf16.msra.mxu0 %v529
    %640 = vmatpush.bf16.msra.mxu0 %v525
    %641 = vmatpush.bf16.msra.mxu0 %v521
    %642 = vmatpush.bf16.msra.mxu0 %v517
    %643 = vmatpush.bf16.msra.mxu0 %v513
    %644 = vmatpush.bf16.msra.mxu0 %v509
    %645 = vmatmul.bf16.gmra.mxu0 %v241
    %v646 = vpop.f32.mrf.mxu0
    %v647 = vadd.f32 %v309, %v646
    %v648 = vpop.f32.mrf.mxu0
    %649 = vdwg.mxu0
    %650 = vmatpush.bf16.msra.mxu0 %v569
    %651 = vmatpush.bf16.msra.mxu0 %v565
    %652 = vmatpush.bf16.msra.mxu0 %v561
    %653 = vmatpush.bf16.msra.mxu0 %v557
    %654 = vmatpush.bf16.msra.mxu0 %v553
    %655 = vmatpush.bf16.msra.mxu0 %v549
    %656 = vmatpush.bf16.msra.mxu0 %v545
    %657 = vmatpush.bf16.msra.mxu0 %v541
    %658 = vmatmul.bf16.gmra.mxu0 %v242
    %v659 = vpop.f32.mrf.mxu0
    %v660 = vadd.f32 %v647, %v659
    %v661 = vpop.f32.mrf.mxu0
    %662 = vdwg.mxu0
    %663 = vmatpush.bf16.msra.mxu0 %v538
    %664 = vmatpush.bf16.msra.mxu0 %v534
    %665 = vmatpush.bf16.msra.mxu0 %v530
    %666 = vmatpush.bf16.msra.mxu0 %v526
    %667 = vmatpush.bf16.msra.mxu0 %v522
    %668 = vmatpush.bf16.msra.mxu0 %v518
    %669 = vmatpush.bf16.msra.mxu0 %v514
    %670 = vmatpush.bf16.msra.mxu0 %v510
    %671 = vmatmul.bf16.gmra.mxu0 %v241
    %v672 = vpop.f32.mrf.mxu0
    %v673 = vadd.f32 %v310, %v672
    %v674 = vpop.f32.mrf.mxu0
    %675 = vdwg.mxu0
    %676 = vmatpush.bf16.msra.mxu0 %v570
    %677 = vmatpush.bf16.msra.mxu0 %v566
    %678 = vmatpush.bf16.msra.mxu0 %v562
    %679 = vmatpush.bf16.msra.mxu0 %v558
    %680 = vmatpush.bf16.msra.mxu0 %v554
    %681 = vmatpush.bf16.msra.mxu0 %v550
    %682 = vmatpush.bf16.msra.mxu0 %v546
    %683 = vmatpush.bf16.msra.mxu0 %v542
    %684 = vmatmul.bf16.gmra.mxu0 %v242
    %v685 = vpop.f32.mrf.mxu0
    %v686 = vadd.f32 %v673, %v685
    %v687 = vpop.f32.mrf.mxu0
    %688 = vdwg.mxu0
    %689 = vmatpush.bf16.msra.mxu0 %v539
    %690 = vmatpush.bf16.msra.mxu0 %v535
    %691 = vmatpush.bf16.msra.mxu0 %v531
    %692 = vmatpush.bf16.msra.mxu0 %v527
    %693 = vmatpush.bf16.msra.mxu0 %v523
    %694 = vmatpush.bf16.msra.mxu0 %v519
    %695 = vmatpush.bf16.msra.mxu0 %v515
    %696 = vmatpush.bf16.msra.mxu0 %v511
    %697 = vmatmul.bf16.gmra.mxu0 %v241
    %v698 = vpop.f32.mrf.mxu0
    %v699 = vadd.f32 %v311, %v698
    %v700 = vpop.f32.mrf.mxu0
    %701 = vdwg.mxu0
    %702 = vmatpush.bf16.msra.mxu0 %v571
    %703 = vmatpush.bf16.msra.mxu0 %v567
    %704 = vmatpush.bf16.msra.mxu0 %v563
    %705 = vmatpush.bf16.msra.mxu0 %v559
    %706 = vmatpush.bf16.msra.mxu0 %v555
    %707 = vmatpush.bf16.msra.mxu0 %v551
    %708 = vmatpush.bf16.msra.mxu0 %v547
    %709 = vmatpush.bf16.msra.mxu0 %v543
    %710 = vmatmul.bf16.gmra.mxu0 %v242
    %v711 = vpop.f32.mrf.mxu0
    %v712 = vadd.f32 %v699, %v711
    %v713 = vpop.f32.mrf.mxu0
    %714 = vdwg.mxu0
    %715 = vmatpush.bf16.msra.mxu0 %v540
    %716 = vmatpush.bf16.msra.mxu0 %v536
    %717 = vmatpush.bf16.msra.mxu0 %v532
    %718 = vmatpush.bf16.msra.mxu0 %v528
    %719 = vmatpush.bf16.msra.mxu0 %v524
    %720 = vmatpush.bf16.msra.mxu0 %v520
    %721 = vmatpush.bf16.msra.mxu0 %v516
    %722 = vmatpush.bf16.msra.mxu0 %v512
    %723 = vmatmul.bf16.gmra.mxu0 %v241
    %v724 = vpop.f32.mrf.mxu0
    %v725 = vadd.f32 %v312, %v724
    %v726 = vpop.f32.mrf.mxu0
    %727 = vdwg.mxu0
    %728 = vmatpush.bf16.msra.mxu0 %v572
    %729 = vmatpush.bf16.msra.mxu0 %v568
    %730 = vmatpush.bf16.msra.mxu0 %v564
    %731 = vmatpush.bf16.msra.mxu0 %v560
    %732 = vmatpush.bf16.msra.mxu0 %v556
    %733 = vmatpush.bf16.msra.mxu0 %v552
    %734 = vmatpush.bf16.msra.mxu0 %v548
    %735 = vmatpush.bf16.msra.mxu0 %v544
    %736 = vmatmul.bf16.gmra.mxu0 %v242
    %v737 = vpop.f32.mrf.mxu0
    %v738 = vadd.f32 %v725, %v737
    %v739 = vpop.f32.mrf.mxu0
    %740 = vdwg.mxu0
    %v741 = vmax.f32 %v660, 0.0
    %v742 = vmax.f32 %v686, 0.0
    %v743 = vmax.f32 %v712, 0.0
    %v744 = vmax.f32 %v738, 0.0
    %v745 = vpack.c.bf16 %v741, %v741
    %v746 = vpack.c.bf16 %v742, %v742
    %v747 = vpack.c.bf16 %v743, %v743
    %v748 = vpack.c.bf16 %v744, %v744
    %v749 = vld [vmem:[%s9] sm:$0xf]
    %v750 = vld [vmem:[%s9 + $0x4] sm:$0xf]
    %v751 = vld [vmem:[%s9 + $0x8] sm:$0xf]
    %v752 = vld [vmem:[%s9 + $0xc] sm:$0xf]
    %v753 = vld [vmem:[%s9 + $0x10] sm:$0xf]
    %v754 = vld [vmem:[%s9 + $0x14] sm:$0xf]
    %v755 = vld [vmem:[%s9 + $0x18] sm:$0xf]
    %v756 = vld [vmem:[%s9 + $0x1c] sm:$0xf]
    %v757 = vld [vmem:[%s9 + $0x20] sm:$0xf]
    %v758 = vld [vmem:[%s9 + $0x24] sm:$0xf]
    %v759 = vld [vmem:[%s9 + $0x28] sm:$0xf]
    %v760 = vld [vmem:[%s9 + $0x2c] sm:$0xf]
    %v761 = vld [vmem:[%s9 + $0x30] sm:$0xf]
    %v762 = vld [vmem:[%s9 + $0x34] sm:$0xf]
    %v763 = vld [vmem:[%s9 + $0x38] sm:$0xf]
    %v764 = vld [vmem:[%s9 + $0x3c] sm:$0xf]
    %v765 = vld [vmem:[%s9 + $0x40] sm:$0xf]
    %v766 = vld [vmem:[%s9 + $0x44] sm:$0xf]
    %v767 = vld [vmem:[%s9 + $0x48] sm:$0xf]
    %v768 = vld [vmem:[%s9 + $0x4c] sm:$0xf]
    %v769 = vld [vmem:[%s9 + $0x50] sm:$0xf]
    %v770 = vld [vmem:[%s9 + $0x54] sm:$0xf]
    %v771 = vld [vmem:[%s9 + $0x58] sm:$0xf]
    %v772 = vld [vmem:[%s9 + $0x5c] sm:$0xf]
    %v773 = vld [vmem:[%s9 + $0x60] sm:$0xf]
    %v774 = vld [vmem:[%s9 + $0x64] sm:$0xf]
    %v775 = vld [vmem:[%s9 + $0x68] sm:$0xf]
    %v776 = vld [vmem:[%s9 + $0x6c] sm:$0xf]
    %v777 = vld [vmem:[%s9 + $0x70] sm:$0xf]
    %v778 = vld [vmem:[%s9 + $0x74] sm:$0xf]
    %v779 = vld [vmem:[%s9 + $0x78] sm:$0xf]
    %v780 = vld [vmem:[%s9 + $0x7c] sm:$0xf]
    %v781 = vld [vmem:[%s9 + $0x80] sm:$0xf]
    %v782 = vld [vmem:[%s9 + $0x84] sm:$0xf]
    %v783 = vld [vmem:[%s9 + $0x88] sm:$0xf]
    %v784 = vld [vmem:[%s9 + $0x8c] sm:$0xf]
    %v785 = vld [vmem:[%s9 + $0x90] sm:$0xf]
    %v786 = vld [vmem:[%s9 + $0x94] sm:$0xf]
    %v787 = vld [vmem:[%s9 + $0x98] sm:$0xf]
    %v788 = vld [vmem:[%s9 + $0x9c] sm:$0xf]
    %v789 = vld [vmem:[%s9 + $0xa0] sm:$0xf]
    %v790 = vld [vmem:[%s9 + $0xa4] sm:$0xf]
    %v791 = vld [vmem:[%s9 + $0xa8] sm:$0xf]
    %v792 = vld [vmem:[%s9 + $0xac] sm:$0xf]
    %v793 = vld [vmem:[%s9 + $0xb0] sm:$0xf]
    %v794 = vld [vmem:[%s9 + $0xb4] sm:$0xf]
    %v795 = vld [vmem:[%s9 + $0xb8] sm:$0xf]
    %v796 = vld [vmem:[%s9 + $0xbc] sm:$0xf]
    %v797 = vld [vmem:[%s9 + $0xc0] sm:$0xf]
    %v798 = vld [vmem:[%s9 + $0xc4] sm:$0xf]
    %v799 = vld [vmem:[%s9 + $0xc8] sm:$0xf]
    %v800 = vld [vmem:[%s9 + $0xcc] sm:$0xf]
    %v801 = vld [vmem:[%s9 + $0xd0] sm:$0xf]
    %v802 = vld [vmem:[%s9 + $0xd4] sm:$0xf]
    %v803 = vld [vmem:[%s9 + $0xd8] sm:$0xf]
    %v804 = vld [vmem:[%s9 + $0xdc] sm:$0xf]
    %v805 = vld [vmem:[%s9 + $0xe0] sm:$0xf]
    %v806 = vld [vmem:[%s9 + $0xe4] sm:$0xf]
    %v807 = vld [vmem:[%s9 + $0xe8] sm:$0xf]
    %v808 = vld [vmem:[%s9 + $0xec] sm:$0xf]
    %v809 = vld [vmem:[%s9 + $0xf0] sm:$0xf]
    %v810 = vld [vmem:[%s9 + $0xf4] sm:$0xf]
    %v811 = vld [vmem:[%s9 + $0xf8] sm:$0xf]
    %v812 = vld [vmem:[%s9 + $0xfc] sm:$0xf]
    %v813 = vld [vmem:[%s10] sm:$0x1]
    %v815 = vperm.slane %v813, 0
    %v881 = vunpack.c.l.b16 %v749
    %v882 = vunpack.c.l.b16 %v750
    %v883 = vunpack.c.l.b16 %v751
    %v884 = vunpack.c.l.b16 %v752
    %v885 = vunpack.c.l.b16 %v753
    %v886 = vunpack.c.l.b16 %v754
    %v887 = vunpack.c.l.b16 %v755
    %v888 = vunpack.c.l.b16 %v756
    %v889 = vunpack.c.l.b16 %v757
    %v890 = vunpack.c.l.b16 %v758
    %v891 = vunpack.c.l.b16 %v759
    %v892 = vunpack.c.l.b16 %v760
    %v893 = vunpack.c.l.b16 %v761
    %v894 = vunpack.c.l.b16 %v762
    %v895 = vunpack.c.l.b16 %v763
    %v896 = vunpack.c.l.b16 %v764
    %v897 = vunpack.c.l.b16 %v765
    %v898 = vunpack.c.l.b16 %v766
    %v899 = vunpack.c.l.b16 %v767
    %v900 = vunpack.c.l.b16 %v768
    %v901 = vunpack.c.l.b16 %v769
    %v902 = vunpack.c.l.b16 %v770
    %v903 = vunpack.c.l.b16 %v771
    %v904 = vunpack.c.l.b16 %v772
    %v905 = vunpack.c.l.b16 %v773
    %v906 = vunpack.c.l.b16 %v774
    %v907 = vunpack.c.l.b16 %v775
    %v908 = vunpack.c.l.b16 %v776
    %v909 = vunpack.c.l.b16 %v777
    %v910 = vunpack.c.l.b16 %v778
    %v911 = vunpack.c.l.b16 %v779
    %v912 = vunpack.c.l.b16 %v780
    %v913 = vunpack.c.l.b16 %v781
    %v914 = vunpack.c.l.b16 %v782
    %v915 = vunpack.c.l.b16 %v783
    %v916 = vunpack.c.l.b16 %v784
    %v917 = vunpack.c.l.b16 %v785
    %v918 = vunpack.c.l.b16 %v786
    %v919 = vunpack.c.l.b16 %v787
    %v920 = vunpack.c.l.b16 %v788
    %v921 = vunpack.c.l.b16 %v789
    %v922 = vunpack.c.l.b16 %v790
    %v923 = vunpack.c.l.b16 %v791
    %v924 = vunpack.c.l.b16 %v792
    %v925 = vunpack.c.l.b16 %v793
    %v926 = vunpack.c.l.b16 %v794
    %v927 = vunpack.c.l.b16 %v795
    %v928 = vunpack.c.l.b16 %v796
    %v929 = vunpack.c.l.b16 %v797
    %v930 = vunpack.c.l.b16 %v798
    %v931 = vunpack.c.l.b16 %v799
    %v932 = vunpack.c.l.b16 %v800
    %v933 = vunpack.c.l.b16 %v801
    %v934 = vunpack.c.l.b16 %v802
    %v935 = vunpack.c.l.b16 %v803
    %v936 = vunpack.c.l.b16 %v804
    %v937 = vunpack.c.l.b16 %v805
    %v938 = vunpack.c.l.b16 %v806
    %v939 = vunpack.c.l.b16 %v807
    %v940 = vunpack.c.l.b16 %v808
    %v941 = vunpack.c.l.b16 %v809
    %v942 = vunpack.c.l.b16 %v810
    %v943 = vunpack.c.l.b16 %v811
    %v944 = vunpack.c.l.b16 %v812
    %v945 = vpack.c.b16 %v882, %v881
    %v946 = vpack.c.b16 %v884, %v883
    %v947 = vpack.c.b16 %v886, %v885
    %v948 = vpack.c.b16 %v888, %v887
    %v949 = vpack.c.b16 %v890, %v889
    %v950 = vpack.c.b16 %v892, %v891
    %v951 = vpack.c.b16 %v894, %v893
    %v952 = vpack.c.b16 %v896, %v895
    %v953 = vpack.c.b16 %v898, %v897
    %v954 = vpack.c.b16 %v900, %v899
    %v955 = vpack.c.b16 %v902, %v901
    %v956 = vpack.c.b16 %v904, %v903
    %v957 = vpack.c.b16 %v906, %v905
    %v958 = vpack.c.b16 %v908, %v907
    %v959 = vpack.c.b16 %v910, %v909
    %v960 = vpack.c.b16 %v912, %v911
    %v961 = vpack.c.b16 %v914, %v913
    %v962 = vpack.c.b16 %v916, %v915
    %v963 = vpack.c.b16 %v918, %v917
    %v964 = vpack.c.b16 %v920, %v919
    %v965 = vpack.c.b16 %v922, %v921
    %v966 = vpack.c.b16 %v924, %v923
    %v967 = vpack.c.b16 %v926, %v925
    %v968 = vpack.c.b16 %v928, %v927
    %v969 = vpack.c.b16 %v930, %v929
    %v970 = vpack.c.b16 %v932, %v931
    %v971 = vpack.c.b16 %v934, %v933
    %v972 = vpack.c.b16 %v936, %v935
    %v973 = vpack.c.b16 %v938, %v937
    %v974 = vpack.c.b16 %v940, %v939
    %v975 = vpack.c.b16 %v942, %v941
    %v976 = vpack.c.b16 %v944, %v943
    %1009 = vmatpush.bf16.msra.mxu0 %v952
    %1010 = vmatpush.bf16.msra.mxu0 %v951
    %1011 = vmatpush.bf16.msra.mxu0 %v950
    %1012 = vmatpush.bf16.msra.mxu0 %v949
    %1013 = vmatpush.bf16.msra.mxu0 %v948
    %1014 = vmatpush.bf16.msra.mxu0 %v947
    %1015 = vmatpush.bf16.msra.mxu0 %v946
    %1016 = vmatpush.bf16.msra.mxu0 %v945
    %1017 = vmatmul.bf16.gmra.mxu0 %v745
    %v1018 = vpop.f32.mrf.mxu0
    %v1019 = vadd.f32 %v815, %v1018
    %v1020 = vpop.f32.mrf.mxu0
    %1021 = vdwg.mxu0
    %1022 = vmatpush.bf16.msra.mxu0 %v960
    %1023 = vmatpush.bf16.msra.mxu0 %v959
    %1024 = vmatpush.bf16.msra.mxu0 %v958
    %1025 = vmatpush.bf16.msra.mxu0 %v957
    %1026 = vmatpush.bf16.msra.mxu0 %v956
    %1027 = vmatpush.bf16.msra.mxu0 %v955
    %1028 = vmatpush.bf16.msra.mxu0 %v954
    %1029 = vmatpush.bf16.msra.mxu0 %v953
    %1030 = vmatmul.bf16.gmra.mxu0 %v746
    %v1031 = vpop.f32.mrf.mxu0
    %v1032 = vadd.f32 %v1019, %v1031
    %v1033 = vpop.f32.mrf.mxu0
    %1034 = vdwg.mxu0
    %1035 = vmatpush.bf16.msra.mxu0 %v968
    %1036 = vmatpush.bf16.msra.mxu0 %v967
    %1037 = vmatpush.bf16.msra.mxu0 %v966
    %1038 = vmatpush.bf16.msra.mxu0 %v965
    %1039 = vmatpush.bf16.msra.mxu0 %v964
    %1040 = vmatpush.bf16.msra.mxu0 %v963
    %1041 = vmatpush.bf16.msra.mxu0 %v962
    %1042 = vmatpush.bf16.msra.mxu0 %v961
    %1043 = vmatmul.bf16.gmra.mxu0 %v747
    %v1044 = vpop.f32.mrf.mxu0
    %v1045 = vadd.f32 %v1032, %v1044
    %v1046 = vpop.f32.mrf.mxu0
    %1047 = vdwg.mxu0
    %1048 = vmatpush.bf16.msra.mxu0 %v976
    %1049 = vmatpush.bf16.msra.mxu0 %v975
    %1050 = vmatpush.bf16.msra.mxu0 %v974
    %1051 = vmatpush.bf16.msra.mxu0 %v973
    %1052 = vmatpush.bf16.msra.mxu0 %v972
    %1053 = vmatpush.bf16.msra.mxu0 %v971
    %1054 = vmatpush.bf16.msra.mxu0 %v970
    %1055 = vmatpush.bf16.msra.mxu0 %v969
    %1056 = vmatmul.bf16.gmra.mxu0 %v748
    %v1057 = vpop.f32.mrf.mxu0
    %v1058 = vadd.f32 %v1045, %v1057
    %v1059 = vpop.f32.mrf.mxu0
    %1060 = vdwg.mxu0
    %v1061 = vsub.f32 0.0, %v1058
    %v1062 = vmul.f32 %v1061, 1.442695
    %v1063 = vpow.pop %v1062
    %v1064 = vadd.f32 %v1063, 1.0
    %v1065 = vrcp.pop %v1064
    %vm1066 = vcmask 261120
    %1067 = vst.msk [vmem:[#allocation5] sm:$0xff] %vm1066, %v1065
    // Predicated region
    $region50: #{tpu_custom_call.1} parent=1 // pred_check
      _
    $region51: #{tpu_custom_call.1} parent=1 // pred_check_branch
      %1069 = sbr.rel (0) target = $region53
    $region52: #{tpu_custom_call.1} parent=1 // pred_region
      %1071 = vsyncadd [#allocation4], 0
      %s1073 = sshll.u32 [#allocation5], 4
      %s1074 = int_to_ptr.vmem [resolvable:$true] %s1073
      %s1075 = sshll.u32 %s11, 4
      %s1076 = int_to_ptr.hbm [resolvable:$true] %s1075
      %1078 = dma.vmem_to_hbm [thread:$0]  %s1074, 128, %s1076, [#allocation4]
    $region53: #{tpu_custom_call.1} parent=1 // pred_fallthru
      _
    // Predicated region
    $region54: #{tpu_custom_call.1} parent=1 // pred_check
      _
    $region55: #{tpu_custom_call.1} parent=1 // pred_check_branch
      %1080 = sbr.rel (0) target = $region57
    $region56: #{tpu_custom_call.1} parent=1 // pred_region
      %1082 = dma.done [#allocation4], 128
    $region57: #{tpu_custom_call.1} parent=1 // pred_fallthru
      _
    %1083 = vsyncpa [#allocation3], 1
    %1084 = vsyncpa [#allocation4], 1

</llo_original>
